<compile_context>
chip_gen: v6e
topology: v6e:2x2x1
jax: 0.10.0
libtpu: 0.0.40
codegen_flags: <defaults>
</compile_context>

<pallas_src>
import math

import jax
import jax.numpy as jnp
from jax.experimental import pallas as pl
from jax.experimental.pallas import tpu as pltpu


# ---------------------------------------------------------------------------
# Pallas kernel: full EAG hot path for one (C, T) channel-major block.
#   g1  = relu(WgT @ g + bg)              (grouped conv + BN + ReLU, BN folded)
#   x1  = relu(WxT @ x + bx)
#   s   = x1 + g1                          (outer ReLU is redundant: x1,g1 >= 0)
#   psi = sigmoid(w_psi @ s + b_psi)       (1x1 conv to 1 ch + BN + sigmoid)
#   out = x * (psi + 1)                    (== x * psi + x)
# ---------------------------------------------------------------------------
def eag_kernel(g_ref, x_ref, wg_ref, bg_ref, wx_ref, bx_ref,
               wpsi_ref, bpsi_ref, out_ref):
    g = g_ref[...]          # (Cg, T)
    x = x_ref[...]          # (Cx, T)

    g1 = jnp.maximum(
        jnp.dot(wg_ref[...], g, preferred_element_type=jnp.float32)
        + bg_ref[...], 0.0)                                   # (F_int, T)
    x1 = jnp.maximum(
        jnp.dot(wx_ref[...], x, preferred_element_type=jnp.float32)
        + bx_ref[...], 0.0)                                   # (F_int, T)

    s = x1 + g1            # relu(x1 + g1) == x1 + g1 (both non-negative)

    psi_lin = (jnp.dot(wpsi_ref[...], s, preferred_element_type=jnp.float32)
               + bpsi_ref[0])                                 # (1, T)
    psi = jax.nn.sigmoid(psi_lin)

    out_ref[...] = x * (psi + 1.0)


def _pick_spatial_tile(hw, target=2048):
    """Largest lane-dense tile (multiple of 128) <= target dividing hw,
    else the full spatial dim (always a legal block)."""
    if hw <= target:
        return hw
    t = (target // 128) * 128
    while t >= 128:
        if hw % t == 0:
            return t
        t -= 128
    return hw


# ---------------------------------------------------------------------------
# Wrapper: NCHW -> (N, C, H*W) free reshape + pallas_call.
# ---------------------------------------------------------------------------
def efficient_attention_gate(g, x, params, *, spatial_tile=2048):
    """g, x: (N, C, H, W) float32 (PyTorch NCHW convention)."""
    WgT, bg, WxT, bx, wpsi, bpsi = params
    N, Cg, H, W = g.shape
    Cx = x.shape[1]
    F_int = WgT.shape[0]
    HW = H * W
    T = _pick_spatial_tile(HW, spatial_tile)

    g3 = g.reshape(N, Cg, HW)   # free view, no data movement
    x3 = x.reshape(N, Cx, HW)

    grid = (N, HW // T)

    out = pl.pallas_call(
        eag_kernel,
        out_shape=jax.ShapeDtypeStruct((N, Cx, HW), jnp.float32),
        grid_spec=pltpu.PrefetchScalarGridSpec(
            num_scalar_prefetch=0,
            grid=grid,
            in_specs=[
                pl.BlockSpec((None, Cg, T), lambda n, s: (n, 0, s)),   # g block
                pl.BlockSpec((None, Cx, T), lambda n, s: (n, 0, s)),   # x block
                pl.BlockSpec((F_int, Cg), lambda n, s: (0, 0)),        # WgT (block-diag)
                pl.BlockSpec((F_int, 1), lambda n, s: (0, 0)),         # bg
                pl.BlockSpec((F_int, Cx), lambda n, s: (0, 0)),        # WxT (block-diag)
                pl.BlockSpec((F_int, 1), lambda n, s: (0, 0)),         # bx
                pl.BlockSpec((1, F_int), lambda n, s: (0, 0)),         # w_psi row
                pl.BlockSpec(memory_space=pltpu.MemorySpace.SMEM),     # b_psi scalar
            ],
            out_specs=pl.BlockSpec((None, Cx, T), lambda n, s: (n, 0, s)),
        ),
        compiler_params=pltpu.CompilerParams(
            dimension_semantics=("parallel", "parallel")),
    )(g3, x3, WgT, bg, WxT, bx, wpsi, bpsi)

    return out.reshape(N, Cx, H, W)


# ---------------------------------------------------------------------------
# Deterministic parameter construction (synthetic, matches module shapes).
# Weights are stored transposed (F_int, C_in) for the channel-major kernel.
# ---------------------------------------------------------------------------
def make_params(key, F_g, F_l, F_int, num_groups):
    eps = 1e-5
    bn_scale = 1.0 / math.sqrt(1.0 + eps)  # gamma=1, beta=0, mean=0, var=1
    ks = jax.random.split(key, 6)

    def grouped_dense_T(key_w, key_b, c_in, c_out, groups):
        in_pg = c_in // groups
        out_pg = c_out // groups
        # torch Conv2d weight shape: (c_out, c_in/groups, 1, 1)
        w = jax.random.normal(key_w, (c_out, in_pg), jnp.float32) / math.sqrt(in_pg)
        b = jax.random.normal(key_b, (c_out,), jnp.float32) * 0.01
        WT = jnp.zeros((c_out, c_in), jnp.float32)        # (F_int, C_in), block-diag
        for o in range(c_out):
            grp = o // out_pg
            WT = WT.at[o, grp * in_pg:(grp + 1) * in_pg].set(w[o])
        return WT, b

    WgT, bg = grouped_dense_T(ks[0], ks[1], F_g, F_int, num_groups)
    WxT, bx = grouped_dense_T(ks[2], ks[3], F_l, F_int, num_groups)

    # Fold eval-mode BN (constant per-channel scale, zero shift) into conv.
    WgT, bg = WgT * bn_scale, bg * bn_scale
    WxT, bx = WxT * bn_scale, bx * bn_scale

    wpsi = jax.random.normal(ks[4], (F_int,), jnp.float32) / math.sqrt(F_int)
    bpsi = jax.random.normal(ks[5], (1,), jnp.float32) * 0.01
    wpsi, bpsi = wpsi * bn_scale, bpsi * bn_scale

    return (WgT, bg.reshape(F_int, 1), WxT, bx.reshape(F_int, 1),
            wpsi.reshape(1, F_int), bpsi.reshape(1))


# ---------------------------------------------------------------------------
# Pure-JAX reference (same math, no Pallas) for a correctness check.
# ---------------------------------------------------------------------------
def ref_forward(g, x, params):
    WgT, bg, WxT, bx, wpsi, bpsi = params
    N, Cg, H, W = g.shape
    Cx = x.shape[1]
    g2 = g.reshape(N, Cg, H * W)
    x2 = x.reshape(N, Cx, H * W)
    g1 = jnp.maximum(jnp.einsum('fc,ncm->nfm', WgT, g2) + bg[None], 0.0)
    x1 = jnp.maximum(jnp.einsum('fc,ncm->nfm', WxT, x2) + bx[None], 0.0)
    s = jnp.maximum(x1 + g1, 0.0)
    psi = jax.nn.sigmoid(jnp.einsum('of,nfm->nom', wpsi, s) + bpsi[0])
    out = x2 * psi + x2
    return out.reshape(N, Cx, H, W)


if __name__ == "__main__":
    # Small shapes consistent with the module: F_g = F_l = F_int = 64,
    # num_groups = 32 (default), batch = 2, spatial = 16x16 (lane-dense 256).
    F_g = F_l = F_int = 64
    num_groups = 32
    N, H, W = 2, 16, 16

    key = jax.random.PRNGKey(0)
    kg, kx, kp = jax.random.split(key, 3)
    g = jax.random.normal(kg, (N, F_g, H, W), jnp.float32)
    x = jax.random.normal(kx, (N, F_l, H, W), jnp.float32)
    params = make_params(kp, F_g, F_l, F_int, num_groups)

    out = efficient_attention_gate(g, x, params)
    out = jax.block_until_ready(out)

    ref = ref_forward(g, x, params)
    assert out.shape == (N, F_l, H, W)
    assert jnp.allclose(out, ref, atol=1e-5, rtol=1e-5)

    print("KERNEL_OK")
</pallas_src>

<mosaic_0001>
module attributes {stable_mosaic.version = 11 : i64} {
  func.func @eag_kernel(%arg0: i32, %arg1: i32, %arg2: memref<1x64x256xf32, #tpu.memory_space<vmem>>, %arg3: memref<1x64x256xf32, #tpu.memory_space<vmem>>, %arg4: memref<64x64xf32, #tpu.memory_space<vmem>>, %arg5: memref<64x1xf32, #tpu.memory_space<vmem>>, %arg6: memref<64x64xf32, #tpu.memory_space<vmem>>, %arg7: memref<64x1xf32, #tpu.memory_space<vmem>>, %arg8: memref<1x64xf32, #tpu.memory_space<vmem>>, %arg9: memref<1xf32, #tpu.memory_space<smem>>, %arg10: memref<1x64x256xf32, #tpu.memory_space<vmem>>) attributes {dimension_semantics = [#tpu.dimension_semantics<parallel>, #tpu.dimension_semantics<parallel>], iteration_bounds = array<i64: 2, 1>, scalar_prefetch = 0 : i64, scratch_operands = 0 : i64, tpu.core_type = #tpu.core_type<tc>, window_params = [{transform_indices = @transform_0, window_bounds = array<i64: 1, 64, 256>}, {transform_indices = @transform_1, window_bounds = array<i64: 1, 64, 256>}, {pipeline_mode = #tpu.pipeline_mode<synchronous>, transform_indices = @transform_2, window_bounds = array<i64: 64, 64>}, {pipeline_mode = #tpu.pipeline_mode<synchronous>, transform_indices = @transform_3, window_bounds = array<i64: 64, 1>}, {pipeline_mode = #tpu.pipeline_mode<synchronous>, transform_indices = @transform_4, window_bounds = array<i64: 64, 64>}, {pipeline_mode = #tpu.pipeline_mode<synchronous>, transform_indices = @transform_5, window_bounds = array<i64: 64, 1>}, {pipeline_mode = #tpu.pipeline_mode<synchronous>, transform_indices = @transform_6, window_bounds = array<i64: 1, 64>}, {transform_indices = @transform_7, window_bounds = array<i64: 1>}, {transform_indices = @transform_8, window_bounds = array<i64: 1, 64, 256>}]} {
    %c0 = arith.constant 0 : index
    %c0_0 = arith.constant 0 : index
    %c0_1 = arith.constant 0 : index
    %0 = vector.load %arg2[%c0, %c0_0, %c0_1] : memref<1x64x256xf32, #tpu.memory_space<vmem>>, vector<1x64x256xf32>
    %1 = vector.shape_cast %0 : vector<1x64x256xf32> to vector<64x256xf32>
    %c0_2 = arith.constant 0 : index
    %c0_3 = arith.constant 0 : index
    %c0_4 = arith.constant 0 : index
    %2 = vector.load %arg3[%c0_2, %c0_3, %c0_4] : memref<1x64x256xf32, #tpu.memory_space<vmem>>, vector<1x64x256xf32>
    %3 = vector.shape_cast %2 : vector<1x64x256xf32> to vector<64x256xf32>
    %c0_5 = arith.constant 0 : index
    %c0_6 = arith.constant 0 : index
    %4 = vector.load %arg4[%c0_5, %c0_6] : memref<64x64xf32, #tpu.memory_space<vmem>>, vector<64x64xf32>
    %cst = arith.constant dense<0.000000e+00> : vector<64x256xf32>
    %5 = tpu.matmul %4, %1, %cst {dimension_numbers = #tpu.dot_dimension_numbers<[1], [0], [0], [1], [0, 0, 1, 1], [], []>} : vector<64x64xf32>, vector<64x256xf32>, vector<64x256xf32> -> vector<64x256xf32>
    %c0_7 = arith.constant 0 : index
    %c0_8 = arith.constant 0 : index
    %6 = vector.load %arg5[%c0_7, %c0_8] : memref<64x1xf32, #tpu.memory_space<vmem>>, vector<64x1xf32>
    %7 = vector.broadcast %6 : vector<64x1xf32> to vector<64x256xf32>
    %8 = arith.addf %5, %7 : vector<64x256xf32>
    %cst_9 = arith.constant 0.000000e+00 : f32
    %9 = vector.broadcast %cst_9 : f32 to vector<64x256xf32>
    %10 = arith.maximumf %8, %9 : vector<64x256xf32>
    %c0_10 = arith.constant 0 : index
    %c0_11 = arith.constant 0 : index
    %11 = vector.load %arg6[%c0_10, %c0_11] : memref<64x64xf32, #tpu.memory_space<vmem>>, vector<64x64xf32>
    %cst_12 = arith.constant dense<0.000000e+00> : vector<64x256xf32>
    %12 = tpu.matmul %11, %3, %cst_12 {dimension_numbers = #tpu.dot_dimension_numbers<[1], [0], [0], [1], [0, 0, 1, 1], [], []>} : vector<64x64xf32>, vector<64x256xf32>, vector<64x256xf32> -> vector<64x256xf32>
    %c0_13 = arith.constant 0 : index
    %c0_14 = arith.constant 0 : index
    %13 = vector.load %arg7[%c0_13, %c0_14] : memref<64x1xf32, #tpu.memory_space<vmem>>, vector<64x1xf32>
    %14 = vector.broadcast %13 : vector<64x1xf32> to vector<64x256xf32>
    %15 = arith.addf %12, %14 : vector<64x256xf32>
    %cst_15 = arith.constant 0.000000e+00 : f32
    %16 = vector.broadcast %cst_15 : f32 to vector<64x256xf32>
    %17 = arith.maximumf %15, %16 : vector<64x256xf32>
    %18 = arith.addf %17, %10 : vector<64x256xf32>
    %c0_16 = arith.constant 0 : index
    %c0_17 = arith.constant 0 : index
    %19 = vector.load %arg8[%c0_16, %c0_17] : memref<1x64xf32, #tpu.memory_space<vmem>>, vector<1x64xf32>
    %cst_18 = arith.constant dense<0.000000e+00> : vector<1x256xf32>
    %20 = tpu.matmul %19, %18, %cst_18 {dimension_numbers = #tpu.dot_dimension_numbers<[1], [0], [0], [1], [0, 0, 1, 1], [], []>} : vector<1x64xf32>, vector<64x256xf32>, vector<1x256xf32> -> vector<1x256xf32>
    %c0_19 = arith.constant 0 : index
    %21 = memref.load %arg9[%c0_19] : memref<1xf32, #tpu.memory_space<smem>>
    %22 = vector.broadcast %21 : f32 to vector<1x256xf32>
    %23 = arith.addf %20, %22 : vector<1x256xf32>
    %24 = arith.negf %23 : vector<1x256xf32>
    %25 = math.exp %24 : vector<1x256xf32>
    %cst_20 = arith.constant 1.000000e+00 : f32
    %26 = vector.broadcast %cst_20 : f32 to vector<1x256xf32>
    %27 = arith.addf %26, %25 : vector<1x256xf32>
    %28 = arith.divf %26, %27 : vector<1x256xf32>
    %cst_21 = arith.constant 1.000000e+00 : f32
    %29 = vector.broadcast %cst_21 : f32 to vector<1x256xf32>
    %30 = arith.addf %28, %29 : vector<1x256xf32>
    %31 = vector.broadcast %30 : vector<1x256xf32> to vector<64x256xf32>
    %32 = arith.mulf %3, %31 : vector<64x256xf32>
    %c0_22 = arith.constant 0 : index
    %c0_23 = arith.constant 0 : index
    %c0_24 = arith.constant 0 : index
    %33 = vector.load %arg10[%c0_22, %c0_23, %c0_24] : memref<1x64x256xf32, #tpu.memory_space<vmem>>, vector<1x64x256xf32>
    %34 = vector.shape_cast %33 : vector<1x64x256xf32> to vector<64x256xf32>
    %35 = vector.shape_cast %32 : vector<64x256xf32> to vector<1x64x256xf32>
    tpu.vector_store %arg10[%c0_22, %c0_23, %c0_24], %35 {strides = array<i32>} : memref<1x64x256xf32, #tpu.memory_space<vmem>>, vector<1x64x256xf32>,
    return
  }
  func.func @transform_0(%arg0: i32, %arg1: i32) -> (i32, i32, i32) {
    %c0_i32 = arith.constant 0 : i32
    %c0_i32_0 = arith.constant 0 : i32
    return %arg0, %c0_i32, %arg1 : i32, i32, i32
  }
  func.func @transform_1(%arg0: i32, %arg1: i32) -> (i32, i32, i32) {
    %c0_i32 = arith.constant 0 : i32
    %c0_i32_0 = arith.constant 0 : i32
    return %arg0, %c0_i32, %arg1 : i32, i32, i32
  }
  func.func @transform_2(%arg0: i32, %arg1: i32) -> (i32, i32) {
    %c0_i32 = arith.constant 0 : i32
    %c0_i32_0 = arith.constant 0 : i32
    %c0_i32_1 = arith.constant 0 : i32
    return %c0_i32, %c0_i32_0 : i32, i32
  }
  func.func @transform_3(%arg0: i32, %arg1: i32) -> (i32, i32) {
    %c0_i32 = arith.constant 0 : i32
    %c0_i32_0 = arith.constant 0 : i32
    %c0_i32_1 = arith.constant 0 : i32
    return %c0_i32, %c0_i32_0 : i32, i32
  }
  func.func @transform_4(%arg0: i32, %arg1: i32) -> (i32, i32) {
    %c0_i32 = arith.constant 0 : i32
    %c0_i32_0 = arith.constant 0 : i32
    %c0_i32_1 = arith.constant 0 : i32
    return %c0_i32, %c0_i32_0 : i32, i32
  }
  func.func @transform_5(%arg0: i32, %arg1: i32) -> (i32, i32) {
    %c0_i32 = arith.constant 0 : i32
    %c0_i32_0 = arith.constant 0 : i32
    %c0_i32_1 = arith.constant 0 : i32
    return %c0_i32, %c0_i32_0 : i32, i32
  }
  func.func @transform_6(%arg0: i32, %arg1: i32) -> (i32, i32) {
    %c0_i32 = arith.constant 0 : i32
    %c0_i32_0 = arith.constant 0 : i32
    %c0_i32_1 = arith.constant 0 : i32
    return %c0_i32, %c0_i32_0 : i32, i32
  }
  func.func @transform_7(%arg0: i32, %arg1: i32) -> i32 {
    %c0_i32 = arith.constant 0 : i32
    %c0_i32_0 = arith.constant 0 : i32
    return %c0_i32 : i32
  }
  func.func @transform_8(%arg0: i32, %arg1: i32) -> (i32, i32, i32) {
    %c0_i32 = arith.constant 0 : i32
    %c0_i32_0 = arith.constant 0 : i32
    return %arg0, %c0_i32, %arg1 : i32, i32, i32
  }
}

</mosaic_0001>

<llo_original>
// kernel: tpu_custom_call.1
$region0: #{tpu_custom_call.1}
  #allocation0 [shape = 'u32[]', space=smem, size = 0x4, offset = 0x4, fixed_abs, tag = 'smem constant byte address 0x4 - core index']
  #allocation1 [shape = 'u32[144,128]{1,0:T(1,128)}', space=vmem, size = 0x12000, scoped, tag = 'internal scratch']
  #allocation2 [shape = 'f32[1]{0:T(128)S(6)}', space=smem, size = 0x200, scoped, tag = 'scoped memory for tpu_custom_call.1']
  %s0 = inlined_call_operand.hbm [shape: f32[2,64,256], index: 0, kind: input, shape index: {}]
  %s1 = inlined_call_operand.hbm [shape: f32[2,64,256], index: 1, kind: input, shape index: {}]
  %s2 = inlined_call_operand.vmem [shape: f32[64,64], index: 2, kind: input, shape index: {}]
  %s3 = inlined_call_operand.vmem [shape: f32[64,1], index: 3, kind: input, shape index: {}]
  %s4 = inlined_call_operand.vmem [shape: f32[64,64], index: 4, kind: input, shape index: {}]
  %s5 = inlined_call_operand.vmem [shape: f32[64,1], index: 5, kind: input, shape index: {}]
  %s6 = inlined_call_operand.vmem [shape: f32[1,64], index: 6, kind: input, shape index: {}]
  %s7 = inlined_call_operand.<no memory space> [shape: f32[1], index: 7, kind: input, shape index: {}]
  %s8 = inlined_call_operand.hbm [shape: f32[2,64,256], index: 8, kind: output, shape index: {}]
  %s9 = sld [smem:[#allocation0]]
  $region73: #{tpu_custom_call.1} parent=0
    _
  %s11 = ssub.s32 1, %s9
  %s12 = scalar_select 0, %s11, %s9
  %13 = sst [smem:[#allocation2]] %s7
  $region1: #{tpu_custom_call.1} parent=0
    #allocation3 [shape = 'u8[131072]{0}', space=vmem, size = 0x20000, scoped, tag = 'input window, operand 0']
    #allocation4 [shape = 's32[2]{0}', space=sflag, size = 0x8, scoped, tag = 'scoped memory for tpu_custom_call.1']
    #allocation5 [shape = 's32[2]{0}', space=sflag, size = 0x8, scoped, tag = 'scoped memory for tpu_custom_call.1']
    #allocation6 [shape = 'u8[131072]{0}', space=vmem, size = 0x20000, scoped, tag = 'input window, operand 1']
    #allocation7 [shape = 's32[2]{0}', space=sflag, size = 0x8, scoped, tag = 'scoped memory for tpu_custom_call.1']
    #allocation8 [shape = 'u8[131072]{0}', space=vmem, size = 0x20000, scoped, tag = 'output window, operand 0']
    %14 = vsyncpa [#allocation4], 0
    %s15 = scalar_lea.sflag [#allocation4], 1
    %16 = vsyncpa %s15, 0
    %17 = vsyncpa [#allocation7], 0
    %s18 = scalar_lea.sflag [#allocation7], 1
    %19 = vsyncpa %s18, 0
    %20 = vsyncpa [#allocation5], 0
    %s21 = scalar_lea.sflag [#allocation5], 1
    %22 = vsyncpa %s21, 0
    loop: start=0, step=1, limit=4
    $region2: #{tpu_custom_call.1} parent=1 // loop_pre_header
      _
    $region3: #{tpu_custom_call.1} parent=1 // loop_header
      %s24 = sphi 0, %s28
      %p25 = scmp.ge.s32.totalorder %s24, 4
      %s31 = sphi 0, %s43
      %s32 = sphi 0, %s39
      %s33 = sphi 0, %s31
      %s34 = sphi 0, %s32
      %s35 = sphi 0, %s33
      %s36 = sphi 0, %s34
      %s48 = sphi 0, %s50
      %s51 = sphi 0, %s48
      %s52 = sphi 0, %s51
      %s68 = sphi 0, %s52
      %s76 = sphi 0, %s78
      %s79 = sphi 0, %s76
      %s80 = sphi 0, %s79
      %s96 = sphi 0, %s80
      %s100 = sphi 0, %s100
      %s102 = sphi 0, %s100
      %s103 = sphi 0, %s102
      %s117 = sphi 0, %s103
      %s121 = sphi 0, %s121
      %s123 = sphi 0, %s121
      %s124 = sphi 0, %s123
      %s138 = sphi 0, %s124
      %s142 = sphi 0, %s142
      %s144 = sphi 0, %s142
      %s145 = sphi 0, %s144
      %s159 = sphi 0, %s145
      %s163 = sphi 0, %s163
      %s165 = sphi 0, %s163
      %s166 = sphi 0, %s165
      %s180 = sphi 0, %s166
      %s184 = sphi 0, %s184
      %s186 = sphi 0, %s184
      %s187 = sphi 0, %s186
      %s201 = sphi 0, %s187
      %s205 = sphi 0, %s205
      %s207 = sphi 0, %s205
      %s208 = sphi 0, %s207
      %s222 = sphi 0, %s208
      %s230 = sphi 0, %s232
      %s233 = sphi 0, %s230
      %s234 = sphi 0, %s233
      %s250 = sphi 0, %s234
    $region4: #{tpu_custom_call.1} parent=1 // loop_header_branch
      %27 = sbr.rel (%p25) target = $region8
    $region5: #{tpu_custom_call.1} parent=1 // loop_body
      %s29 = ssub.s32 %s24, 1
      %s30 = ssub.s32 %s24, 2
      %s37 = sadd.s32 1, %s32
      %p38 = scmp.ge.s32.totalorder %s37, 1
      %s39 = scalar_select %p38, 0, %s37
      %s40 = sadd.s32 1, %s31
      %s41 = scalar_select %p38, %s40, %s31
      %p42 = scmp.ge.s32.totalorder %s41, 2
      %s43 = scalar_select %p42, 0, %s41
      %s44 = ssub.s32 %s31, %s43
      %s45 = ssub.s32 %s32, %s39
      %s46 = sor.u32 %s44, %s45
      %p47 = scmp.eq.s32.totalorder %s46, 0
      %s49 = sadd.s32 %s48, 1
      %s50 = scalar_select %p47, %s48, %s49
      %p53 = pneg %p47
      %p54 = scmp.eq.s32.totalorder %s24, 1
      %p55 = por %p53, %p54
      %p56 = scmp.ne.s32.totalorder %s48, %s51
      %p57 = scmp.eq.s32.totalorder %s24, 0
      %p58 = por %p56, %p57
      %p59 = scmp.ne.s32.totalorder %s48, %s51
      %p60 = scmp.eq.s32.totalorder %s29, 1
      %p61 = por %p59, %p60
      %p62 = scmp.ne.s32.totalorder %s51, %s52
      %p63 = scmp.eq.s32.totalorder %s29, 0
      %p64 = por %p62, %p63
      %p65 = scmp.ne.s32.totalorder %s51, %s52
      %p66 = scmp.eq.s32.totalorder %s30, 1
      %p67 = por %p65, %p66
      %p69 = scmp.ne.s32.totalorder %s52, %s68
      %p70 = scmp.eq.s32.totalorder %s30, 0
      %p71 = por %p69, %p70
      %s72 = ssub.s32 %s31, %s43
      %s73 = ssub.s32 %s32, %s39
      %s74 = sor.u32 %s72, %s73
      %p75 = scmp.eq.s32.totalorder %s74, 0
      %s77 = sadd.s32 %s76, 1
      %s78 = scalar_select %p75, %s76, %s77
      %p81 = pneg %p75
      %p82 = scmp.eq.s32.totalorder %s24, 1
      %p83 = por %p81, %p82
      %p84 = scmp.ne.s32.totalorder %s76, %s79
      %p85 = scmp.eq.s32.totalorder %s24, 0
      %p86 = por %p84, %p85
      %p87 = scmp.ne.s32.totalorder %s76, %s79
      %p88 = scmp.eq.s32.totalorder %s29, 1
      %p89 = por %p87, %p88
      %p90 = scmp.ne.s32.totalorder %s79, %s80
      %p91 = scmp.eq.s32.totalorder %s29, 0
      %p92 = por %p90, %p91
      %p93 = scmp.ne.s32.totalorder %s79, %s80
      %p94 = scmp.eq.s32.totalorder %s30, 1
      %p95 = por %p93, %p94
      %p97 = scmp.ne.s32.totalorder %s80, %s96
      %p98 = scmp.eq.s32.totalorder %s30, 0
      %p99 = por %p97, %p98
      %s101 = sadd.s32 %s100, 1
      %p104 = scmp.eq.s32.totalorder %s24, 1
      %p105 = scmp.ne.s32.totalorder %s100, %s102
      %p106 = scmp.eq.s32.totalorder %s24, 0
      %p107 = por %p105, %p106
      %p108 = scmp.ne.s32.totalorder %s100, %s102
      %p109 = scmp.eq.s32.totalorder %s29, 1
      %p110 = por %p108, %p109
      %p111 = scmp.ne.s32.totalorder %s102, %s103
      %p112 = scmp.eq.s32.totalorder %s29, 0
      %p113 = por %p111, %p112
      %p114 = scmp.ne.s32.totalorder %s102, %s103
      %p115 = scmp.eq.s32.totalorder %s30, 1
      %p116 = por %p114, %p115
      %p118 = scmp.ne.s32.totalorder %s103, %s117
      %p119 = scmp.eq.s32.totalorder %s30, 0
      %p120 = por %p118, %p119
      %s122 = sadd.s32 %s121, 1
      %p125 = scmp.eq.s32.totalorder %s24, 1
      %p126 = scmp.ne.s32.totalorder %s121, %s123
      %p127 = scmp.eq.s32.totalorder %s24, 0
      %p128 = por %p126, %p127
      %p129 = scmp.ne.s32.totalorder %s121, %s123
      %p130 = scmp.eq.s32.totalorder %s29, 1
      %p131 = por %p129, %p130
      %p132 = scmp.ne.s32.totalorder %s123, %s124
      %p133 = scmp.eq.s32.totalorder %s29, 0
      %p134 = por %p132, %p133
      %p135 = scmp.ne.s32.totalorder %s123, %s124
      %p136 = scmp.eq.s32.totalorder %s30, 1
      %p137 = por %p135, %p136
      %p139 = scmp.ne.s32.totalorder %s124, %s138
      %p140 = scmp.eq.s32.totalorder %s30, 0
      %p141 = por %p139, %p140
      %s143 = sadd.s32 %s142, 1
      %p146 = scmp.eq.s32.totalorder %s24, 1
      %p147 = scmp.ne.s32.totalorder %s142, %s144
      %p148 = scmp.eq.s32.totalorder %s24, 0
      %p149 = por %p147, %p148
      %p150 = scmp.ne.s32.totalorder %s142, %s144
      %p151 = scmp.eq.s32.totalorder %s29, 1
      %p152 = por %p150, %p151
      %p153 = scmp.ne.s32.totalorder %s144, %s145
      %p154 = scmp.eq.s32.totalorder %s29, 0
      %p155 = por %p153, %p154
      %p156 = scmp.ne.s32.totalorder %s144, %s145
      %p157 = scmp.eq.s32.totalorder %s30, 1
      %p158 = por %p156, %p157
      %p160 = scmp.ne.s32.totalorder %s145, %s159
      %p161 = scmp.eq.s32.totalorder %s30, 0
      %p162 = por %p160, %p161
      %s164 = sadd.s32 %s163, 1
      %p167 = scmp.eq.s32.totalorder %s24, 1
      %p168 = scmp.ne.s32.totalorder %s163, %s165
      %p169 = scmp.eq.s32.totalorder %s24, 0
      %p170 = por %p168, %p169
      %p171 = scmp.ne.s32.totalorder %s163, %s165
      %p172 = scmp.eq.s32.totalorder %s29, 1
      %p173 = por %p171, %p172
      %p174 = scmp.ne.s32.totalorder %s165, %s166
      %p175 = scmp.eq.s32.totalorder %s29, 0
      %p176 = por %p174, %p175
      %p177 = scmp.ne.s32.totalorder %s165, %s166
      %p178 = scmp.eq.s32.totalorder %s30, 1
      %p179 = por %p177, %p178
      %p181 = scmp.ne.s32.totalorder %s166, %s180
      %p182 = scmp.eq.s32.totalorder %s30, 0
      %p183 = por %p181, %p182
      %s185 = sadd.s32 %s184, 1
      %p188 = scmp.eq.s32.totalorder %s24, 1
      %p189 = scmp.ne.s32.totalorder %s184, %s186
      %p190 = scmp.eq.s32.totalorder %s24, 0
      %p191 = por %p189, %p190
      %p192 = scmp.ne.s32.totalorder %s184, %s186
      %p193 = scmp.eq.s32.totalorder %s29, 1
      %p194 = por %p192, %p193
      %p195 = scmp.ne.s32.totalorder %s186, %s187
      %p196 = scmp.eq.s32.totalorder %s29, 0
      %p197 = por %p195, %p196
      %p198 = scmp.ne.s32.totalorder %s186, %s187
      %p199 = scmp.eq.s32.totalorder %s30, 1
      %p200 = por %p198, %p199
      %p202 = scmp.ne.s32.totalorder %s187, %s201
      %p203 = scmp.eq.s32.totalorder %s30, 0
      %p204 = por %p202, %p203
      %s206 = sadd.s32 %s205, 1
      %p209 = scmp.eq.s32.totalorder %s24, 1
      %p210 = scmp.ne.s32.totalorder %s205, %s207
      %p211 = scmp.eq.s32.totalorder %s24, 0
      %p212 = por %p210, %p211
      %p213 = scmp.ne.s32.totalorder %s205, %s207
      %p214 = scmp.eq.s32.totalorder %s29, 1
      %p215 = por %p213, %p214
      %p216 = scmp.ne.s32.totalorder %s207, %s208
      %p217 = scmp.eq.s32.totalorder %s29, 0
      %p218 = por %p216, %p217
      %p219 = scmp.ne.s32.totalorder %s207, %s208
      %p220 = scmp.eq.s32.totalorder %s30, 1
      %p221 = por %p219, %p220
      %p223 = scmp.ne.s32.totalorder %s208, %s222
      %p224 = scmp.eq.s32.totalorder %s30, 0
      %p225 = por %p223, %p224
      %s226 = ssub.s32 %s31, %s43
      %s227 = ssub.s32 %s32, %s39
      %s228 = sor.u32 %s226, %s227
      %p229 = scmp.eq.s32.totalorder %s228, 0
      %s231 = sadd.s32 %s230, 1
      %s232 = scalar_select %p229, %s230, %s231
      %p235 = pneg %p229
      %p236 = scmp.eq.s32.totalorder %s24, 1
      %p237 = por %p235, %p236
      %p238 = scmp.ne.s32.totalorder %s230, %s233
      %p239 = scmp.eq.s32.totalorder %s24, 0
      %p240 = por %p238, %p239
      %p241 = scmp.ne.s32.totalorder %s230, %s233
      %p242 = scmp.eq.s32.totalorder %s29, 1
      %p243 = por %p241, %p242
      %p244 = scmp.ne.s32.totalorder %s233, %s234
      %p245 = scmp.eq.s32.totalorder %s29, 0
      %p246 = por %p244, %p245
      %p247 = scmp.ne.s32.totalorder %s233, %s234
      %p248 = scmp.eq.s32.totalorder %s30, 1
      %p249 = por %p247, %p248
      %p251 = scmp.ne.s32.totalorder %s234, %s250
      %p252 = scmp.eq.s32.totalorder %s30, 0
      %p253 = por %p251, %p252
      %p254 = scmp.le.s32.totalorder 1, %s24
      %p255 = scmp.lt.s32.totalorder %s24, 3
      %p256 = pnand %p254, %p255
      %p257 = pneg %p256
      // Predicated region
      $region9: #{tpu_custom_call.1} parent=5 // pred_check
        _
      $region10: #{tpu_custom_call.1} parent=5 // pred_check_branch
        %259 = sbr.rel (%p256) target = $region12
      $region11: #{tpu_custom_call.1} parent=5 // pred_region
        %s260 = ssub.s32 %s24, 1
        // Predicated region
        $region13: #{tpu_custom_call.1} parent=11 // pred_check
          %p261 = pneg %p113
        $region14: #{tpu_custom_call.1} parent=11 // pred_check_branch
          %263 = sbr.rel (%p261) target = $region16
        $region15: #{tpu_custom_call.1} parent=11 // pred_region
          _
        $region16: #{tpu_custom_call.1} parent=11 // pred_fallthru
          _
        // Predicated region
        $region17: #{tpu_custom_call.1} parent=11 // pred_check
          %p264 = pneg %p134
        $region18: #{tpu_custom_call.1} parent=11 // pred_check_branch
          %266 = sbr.rel (%p264) target = $region20
        $region19: #{tpu_custom_call.1} parent=11 // pred_region
          _
        $region20: #{tpu_custom_call.1} parent=11 // pred_fallthru
          _
        // Predicated region
        $region21: #{tpu_custom_call.1} parent=11 // pred_check
          %p267 = pneg %p155
        $region22: #{tpu_custom_call.1} parent=11 // pred_check_branch
          %269 = sbr.rel (%p267) target = $region24
        $region23: #{tpu_custom_call.1} parent=11 // pred_region
          _
        $region24: #{tpu_custom_call.1} parent=11 // pred_fallthru
          _
        // Predicated region
        $region25: #{tpu_custom_call.1} parent=11 // pred_check
          %p270 = pneg %p176
        $region26: #{tpu_custom_call.1} parent=11 // pred_check_branch
          %272 = sbr.rel (%p270) target = $region28
        $region27: #{tpu_custom_call.1} parent=11 // pred_region
          _
        $region28: #{tpu_custom_call.1} parent=11 // pred_fallthru
          _
        // Predicated region
        $region29: #{tpu_custom_call.1} parent=11 // pred_check
          %p273 = pneg %p197
        $region30: #{tpu_custom_call.1} parent=11 // pred_check_branch
          %275 = sbr.rel (%p273) target = $region32
        $region31: #{tpu_custom_call.1} parent=11 // pred_region
          _
        $region32: #{tpu_custom_call.1} parent=11 // pred_fallthru
          _
        // Predicated region
        $region33: #{tpu_custom_call.1} parent=11 // pred_check
          %p276 = pneg %p218
        $region34: #{tpu_custom_call.1} parent=11 // pred_check_branch
          %278 = sbr.rel (%p276) target = $region36
        $region35: #{tpu_custom_call.1} parent=11 // pred_region
          _
        $region36: #{tpu_custom_call.1} parent=11 // pred_fallthru
          _
      $region12: #{tpu_custom_call.1} parent=5 // pred_fallthru
        _
      %p279 = scmp.lt.s32.totalorder %s24, 2
      // Predicated region
      $region37: #{tpu_custom_call.1} parent=5 // pred_check
        %p280 = pneg %p279
      $region38: #{tpu_custom_call.1} parent=5 // pred_check_branch
        %282 = sbr.rel (%p280) target = $region40
      $region39: #{tpu_custom_call.1} parent=5 // pred_region
        // Predicated region
        $region41: #{tpu_custom_call.1} parent=39 // pred_check
          %p283 = pneg %p58
        $region42: #{tpu_custom_call.1} parent=39 // pred_check_branch
          %285 = sbr.rel (%p283) target = $region44
        $region43: #{tpu_custom_call.1} parent=39 // pred_region
          %s286 = sand.u32 %s48, 1
          %s287 = scalar_lea.sflag [#allocation4], %s286
          %s288 = sand.u32 %s48, 1
          %s289 = smul.addr %s288, 128
          %s290 = scalar_lea.vmem [#allocation3], %s289
          %s291 = smul.u32 2, %s32
          %s293 = ssub.s32 2048, 2048
          %294 = vsyncadd %s287, %s293
          %s295 = smul.addr %s31, 16
          %s296 = sadd.s32 %s291, %s295
          %s297 = smul.addr %s296, 128
          %s298 = scalar_lea.hbm %s0, %s297
          %s299 = sshll.u32 %s290, 4
          %s300 = int_to_ptr.vmem [resolvable:$true] %s299
          %305 = dma.hbm_to_vmem [thread:$0]  %s298, 2048, %s300, %s287, 256, 256, 16
        $region44: #{tpu_custom_call.1} parent=39 // pred_fallthru
          _
        // Predicated region
        $region45: #{tpu_custom_call.1} parent=39 // pred_check
          %p306 = pneg %p86
        $region46: #{tpu_custom_call.1} parent=39 // pred_check_branch
          %308 = sbr.rel (%p306) target = $region48
        $region47: #{tpu_custom_call.1} parent=39 // pred_region
          %s309 = sand.u32 %s76, 1
          %s310 = scalar_lea.sflag [#allocation7], %s309
          %s311 = sand.u32 %s76, 1
          %s312 = smul.addr %s311, 128
          %s313 = scalar_lea.vmem [#allocation6], %s312
          %s314 = smul.u32 2, %s32
          %s316 = ssub.s32 2048, 2048
          %317 = vsyncadd %s310, %s316
          %s318 = smul.addr %s31, 16
          %s319 = sadd.s32 %s314, %s318
          %s320 = smul.addr %s319, 128
          %s321 = scalar_lea.hbm %s1, %s320
          %s322 = sshll.u32 %s313, 4
          %s323 = int_to_ptr.vmem [resolvable:$true] %s322
          %328 = dma.hbm_to_vmem [thread:$0]  %s321, 2048, %s323, %s310, 256, 256, 16
        $region48: #{tpu_custom_call.1} parent=39 // pred_fallthru
          _
      $region40: #{tpu_custom_call.1} parent=5 // pred_fallthru
        _
      %p329 = scmp.le.s32.totalorder 1, %s24
      %p330 = scmp.lt.s32.totalorder %s24, 3
      %p331 = pnand %p329, %p330
      %p332 = pneg %p331
      // Predicated region
      $region49: #{tpu_custom_call.1} parent=5 // pred_check
        _
      $region50: #{tpu_custom_call.1} parent=5 // pred_check_branch
        %334 = sbr.rel (%p331) target = $region52
      $region51: #{tpu_custom_call.1} parent=5 // pred_region
        %s335 = ssub.s32 %s24, 1
        %s336 = sand.u32 %s51, 1
        %s337 = scalar_lea.sflag [#allocation4], %s336
        %s338 = sand.u32 %s51, 1
        %s339 = smul.addr %s338, 128
        %s340 = scalar_lea.vmem [#allocation3], %s339
        // Predicated region
        $region53: #{tpu_custom_call.1} parent=51 // pred_check
          %p341 = pneg %p64
        $region54: #{tpu_custom_call.1} parent=51 // pred_check_branch
          %343 = sbr.rel (%p341) target = $region56
        $region55: #{tpu_custom_call.1} parent=51 // pred_region
          %344 = dma.done %s337, 2048
        $region56: #{tpu_custom_call.1} parent=51 // pred_fallthru
          _
        %s345 = sand.u32 %s79, 1
        %s346 = scalar_lea.sflag [#allocation7], %s345
        %s347 = sand.u32 %s79, 1
        %s348 = smul.addr %s347, 128
        %s349 = scalar_lea.vmem [#allocation6], %s348
        // Predicated region
        $region57: #{tpu_custom_call.1} parent=51 // pred_check
          %p350 = pneg %p92
        $region58: #{tpu_custom_call.1} parent=51 // pred_check_branch
          %352 = sbr.rel (%p350) target = $region60
        $region59: #{tpu_custom_call.1} parent=51 // pred_region
          %353 = dma.done %s346, 2048
        $region60: #{tpu_custom_call.1} parent=51 // pred_fallthru
          _
        %s354 = sand.u32 %s51, 1
        %s355 = scalar_lea.sflag [#allocation4], %s354
        %s356 = sand.u32 %s51, 1
        %s357 = smul.addr %s356, 128
        %s358 = scalar_lea.vmem [#allocation3], %s357
        %p359 = pneg %p64
        %p360 = pneg %p61
        %s361 = sand.u32 %s79, 1
        %s362 = scalar_lea.sflag [#allocation7], %s361
        %s363 = sand.u32 %s79, 1
        %s364 = smul.addr %s363, 128
        %s365 = scalar_lea.vmem [#allocation6], %s364
        %p366 = pneg %p92
        %p367 = pneg %p89
        %p368 = pneg %p113
        %p369 = pneg %p110
        %p370 = pneg %p134
        %p371 = pneg %p131
        %p372 = pneg %p155
        %p373 = pneg %p152
        %p374 = pneg %p176
        %p375 = pneg %p173
        %p376 = pneg %p197
        %p377 = pneg %p194
        %p378 = pneg %p218
        %p379 = pneg %p215
        %p380 = pneg %p246
        %p381 = pneg %p243
        %s382 = sand.u32 %s233, 1
        %s383 = scalar_lea.sflag [#allocation5], %s382
        %s384 = sand.u32 %s233, 1
        %s385 = smul.addr %s384, 128
        %s386 = scalar_lea.vmem [#allocation8], %s385
        %s387 = smul.u32 2, %s34
        %s388 = smul.u32 2, %s34
        %s389 = smul.u32 2, %s34
        %v390 = vld [vmem:[%s340] sm:$0xff]
        %v391 = vld [vmem:[%s340 + $0x8] sm:$0xff]
        %v392 = vld [vmem:[%s340 + $0x10] sm:$0xff]
        %v393 = vld [vmem:[%s340 + $0x18] sm:$0xff]
        %v394 = vld [vmem:[%s340 + $0x20] sm:$0xff]
        %v395 = vld [vmem:[%s340 + $0x28] sm:$0xff]
        %v396 = vld [vmem:[%s340 + $0x30] sm:$0xff]
        %v397 = vld [vmem:[%s340 + $0x38] sm:$0xff]
        %v398 = vld [vmem:[%s340 + $0x40] sm:$0xff]
        %v399 = vld [vmem:[%s340 + $0x48] sm:$0xff]
        %v400 = vld [vmem:[%s340 + $0x50] sm:$0xff]
        %v401 = vld [vmem:[%s340 + $0x58] sm:$0xff]
        %v402 = vld [vmem:[%s340 + $0x60] sm:$0xff]
        %v403 = vld [vmem:[%s340 + $0x68] sm:$0xff]
        %v404 = vld [vmem:[%s340 + $0x70] sm:$0xff]
        %v405 = vld [vmem:[%s340 + $0x78] sm:$0xff]
        %v406 = vld [vmem:[%s349] sm:$0xff]
        %v407 = vld [vmem:[%s349 + $0x8] sm:$0xff]
        %v408 = vld [vmem:[%s349 + $0x10] sm:$0xff]
        %v409 = vld [vmem:[%s349 + $0x18] sm:$0xff]
        %v410 = vld [vmem:[%s349 + $0x20] sm:$0xff]
        %v411 = vld [vmem:[%s349 + $0x28] sm:$0xff]
        %v412 = vld [vmem:[%s349 + $0x30] sm:$0xff]
        %v413 = vld [vmem:[%s349 + $0x38] sm:$0xff]
        %v414 = vld [vmem:[%s349 + $0x40] sm:$0xff]
        %v415 = vld [vmem:[%s349 + $0x48] sm:$0xff]
        %v416 = vld [vmem:[%s349 + $0x50] sm:$0xff]
        %v417 = vld [vmem:[%s349 + $0x58] sm:$0xff]
        %v418 = vld [vmem:[%s349 + $0x60] sm:$0xff]
        %v419 = vld [vmem:[%s349 + $0x68] sm:$0xff]
        %v420 = vld [vmem:[%s349 + $0x70] sm:$0xff]
        %v421 = vld [vmem:[%s349 + $0x78] sm:$0xff]
        %v422 = vld [vmem:[%s2] sm:$0xff]
        %v423 = vld [vmem:[%s2 + $0x8] sm:$0xff]
        %v424 = vld [vmem:[%s2 + $0x10] sm:$0xff]
        %v425 = vld [vmem:[%s2 + $0x18] sm:$0xff]
        %v426 = vld [vmem:[%s2 + $0x20] sm:$0xff]
        %v427 = vld [vmem:[%s2 + $0x28] sm:$0xff]
        %v428 = vld [vmem:[%s2 + $0x30] sm:$0xff]
        %v429 = vld [vmem:[%s2 + $0x38] sm:$0xff]
        %v430 = vld [vmem:[%s3] sm:$0xff]
        %v431 = vld [vmem:[%s3 + $0x8] sm:$0xff]
        %v432 = vld [vmem:[%s3 + $0x10] sm:$0xff]
        %v433 = vld [vmem:[%s3 + $0x18] sm:$0xff]
        %v434 = vld [vmem:[%s3 + $0x20] sm:$0xff]
        %v435 = vld [vmem:[%s3 + $0x28] sm:$0xff]
        %v436 = vld [vmem:[%s3 + $0x30] sm:$0xff]
        %v437 = vld [vmem:[%s3 + $0x38] sm:$0xff]
        %439 = vset.pattern.permute.xlu0 0
        %440 = vperm.xlu0 %439, %v430
        %v441 = vpop.permute.xlu0 %440
        %444 = vset.pattern.permute.xlu0 0
        %445 = vperm.xlu0 %444, %v431
        %v446 = vpop.permute.xlu0 %445
        %449 = vset.pattern.permute.xlu0 0
        %450 = vperm.xlu0 %449, %v432
        %v451 = vpop.permute.xlu0 %450
        %454 = vset.pattern.permute.xlu0 0
        %455 = vperm.xlu0 %454, %v433
        %v456 = vpop.permute.xlu0 %455
        %459 = vset.pattern.permute.xlu0 0
        %460 = vperm.xlu0 %459, %v434
        %v461 = vpop.permute.xlu0 %460
        %464 = vset.pattern.permute.xlu0 0
        %465 = vperm.xlu0 %464, %v435
        %v466 = vpop.permute.xlu0 %465
        %469 = vset.pattern.permute.xlu0 0
        %470 = vperm.xlu0 %469, %v436
        %v471 = vpop.permute.xlu0 %470
        %474 = vset.pattern.permute.xlu0 0
        %475 = vperm.xlu0 %474, %v437
        %v476 = vpop.permute.xlu0 %475
        %vm478 = vcmask 523264
        %v480 = vsel %vm478, %v422, 0
        %v483 = vsel %vm478, %v423, 0
        %v486 = vsel %vm478, %v424, 0
        %v489 = vsel %vm478, %v425, 0
        %v492 = vsel %vm478, %v426, 0
        %v495 = vsel %vm478, %v427, 0
        %v498 = vsel %vm478, %v428, 0
        %v501 = vsel %vm478, %v429, 0
        %503 = vmatprep.subr.mxu0 0.0
        %504 = vmatpush1.msra.mxu0 0.0
        %505 = vmatprep.subr.mxu0 0.0
        %506 = vmatpush1.msra.mxu0 0.0
        %507 = vmatprep.subr.mxu0 0.0
        %508 = vmatpush1.msra.mxu0 0.0
        %509 = vmatprep.subr.mxu0 0.0
        %510 = vmatpush1.msra.mxu0 0.0
        %511 = vmatprep.subr.mxu0 0.0
        %512 = vmatpush1.msra.mxu0 0.0
        %513 = vmatprep.subr.mxu0 0.0
        %514 = vmatpush1.msra.mxu0 0.0
        %515 = vmatprep.subr.mxu0 0.0
        %516 = vmatpush1.msra.mxu0 0.0
        %517 = vmatprep.subr.mxu0 0.0
        %518 = vmatpush1.msra.mxu0 0.0
        %519 = vmatprep.subr.mxu0 %v405
        %520 = vmatpush1.msra.mxu0 %v404
        %521 = vmatprep.subr.mxu0 %v403
        %522 = vmatpush1.msra.mxu0 %v402
        %523 = vmatprep.subr.mxu0 %v401
        %524 = vmatpush1.msra.mxu0 %v400
        %525 = vmatprep.subr.mxu0 %v399
        %526 = vmatpush1.msra.mxu0 %v398
        %527 = vmatprep.subr.mxu0 %v397
        %528 = vmatpush1.msra.mxu0 %v396
        %529 = vmatprep.subr.mxu0 %v395
        %530 = vmatpush1.msra.mxu0 %v394
        %531 = vmatprep.subr.mxu0 %v393
        %532 = vmatpush1.msra.mxu0 %v392
        %533 = vmatprep.subr.mxu0 %v391
        %534 = vmatpush1.msra.mxu0 %v390
        %535 = vmatprep.subr.mxu0 0.0
        %536 = vmatpush2.msra.mxu0 0.0
        %537 = vmatprep.subr.mxu0 0.0
        %538 = vmatpush2.msra.mxu0 0.0
        %539 = vmatprep.subr.mxu0 0.0
        %540 = vmatpush2.msra.mxu0 0.0
        %541 = vmatprep.subr.mxu0 0.0
        %542 = vmatpush2.msra.mxu0 0.0
        %543 = vmatprep.subr.mxu0 0.0
        %544 = vmatpush2.msra.mxu0 0.0
        %545 = vmatprep.subr.mxu0 0.0
        %546 = vmatpush2.msra.mxu0 0.0
        %547 = vmatprep.subr.mxu0 0.0
        %548 = vmatpush2.msra.mxu0 0.0
        %549 = vmatprep.subr.mxu0 0.0
        %550 = vmatpush2.msra.mxu0 0.0
        %551 = vmatprep.subr.mxu0 0.0
        %552 = vmatpush2.msra.mxu0 0.0
        %553 = vmatprep.subr.mxu0 0.0
        %554 = vmatpush2.msra.mxu0 0.0
        %555 = vmatprep.subr.mxu0 0.0
        %556 = vmatpush2.msra.mxu0 0.0
        %557 = vmatprep.subr.mxu0 0.0
        %558 = vmatpush2.msra.mxu0 0.0
        %559 = vmatprep.subr.mxu0 0.0
        %560 = vmatpush2.msra.mxu0 0.0
        %561 = vmatprep.subr.mxu0 0.0
        %562 = vmatpush2.msra.mxu0 0.0
        %563 = vmatprep.subr.mxu0 0.0
        %564 = vmatpush2.msra.mxu0 0.0
        %565 = vmatprep.subr.mxu0 0.0
        %566 = vmatpush2.msra.mxu0 0.0
        %567 = vmatprep.mubr.f32.mxu0 0.0
        %568 = vmatmul.mubr.f32.gmra.mxu0 %v480
        %v569 = vpop.f32.mrf.mxu0
        %v570 = vadd.f32 %v441, %v569
        %v571 = vpop.f32.mrf.mxu0
        %v572 = vadd.f32 %v441, %v571
        %573 = vmatprep.mubr.f32.mxu0 0.0
        %574 = vmatmul.mubr.f32.gmra.mxu0 %v483
        %v575 = vpop.f32.mrf.mxu0
        %v576 = vadd.f32 %v446, %v575
        %v577 = vpop.f32.mrf.mxu0
        %v578 = vadd.f32 %v446, %v577
        %579 = vmatprep.mubr.f32.mxu0 0.0
        %580 = vmatmul.mubr.f32.gmra.mxu0 %v486
        %v581 = vpop.f32.mrf.mxu0
        %v582 = vadd.f32 %v451, %v581
        %v583 = vpop.f32.mrf.mxu0
        %v584 = vadd.f32 %v451, %v583
        %585 = vmatprep.mubr.f32.mxu0 0.0
        %586 = vmatmul.mubr.f32.gmra.mxu0 %v489
        %v587 = vpop.f32.mrf.mxu0
        %v588 = vadd.f32 %v456, %v587
        %v589 = vpop.f32.mrf.mxu0
        %v590 = vadd.f32 %v456, %v589
        %591 = vmatprep.mubr.f32.mxu0 0.0
        %592 = vmatmul.mubr.f32.gmra.mxu0 %v492
        %v593 = vpop.f32.mrf.mxu0
        %v594 = vadd.f32 %v461, %v593
        %v595 = vpop.f32.mrf.mxu0
        %v596 = vadd.f32 %v461, %v595
        %597 = vmatprep.mubr.f32.mxu0 0.0
        %598 = vmatmul.mubr.f32.gmra.mxu0 %v495
        %v599 = vpop.f32.mrf.mxu0
        %v600 = vadd.f32 %v466, %v599
        %v601 = vpop.f32.mrf.mxu0
        %v602 = vadd.f32 %v466, %v601
        %603 = vmatprep.mubr.f32.mxu0 0.0
        %604 = vmatmul.mubr.f32.gmra.mxu0 %v498
        %v605 = vpop.f32.mrf.mxu0
        %v606 = vadd.f32 %v471, %v605
        %v607 = vpop.f32.mrf.mxu0
        %v608 = vadd.f32 %v471, %v607
        %609 = vmatprep.mubr.f32.mxu0 0.0
        %610 = vmatmul.mubr.f32.gmra.mxu0 %v501
        %v611 = vpop.f32.mrf.mxu0
        %v612 = vadd.f32 %v476, %v611
        %v613 = vpop.f32.mrf.mxu0
        %v614 = vadd.f32 %v476, %v613
        %615 = vdwg.mxu0
        %v616 = vmax.f32 %v570, 0.0
        %v617 = vmax.f32 %v572, 0.0
        %v618 = vmax.f32 %v576, 0.0
        %v619 = vmax.f32 %v578, 0.0
        %v620 = vmax.f32 %v582, 0.0
        %v621 = vmax.f32 %v584, 0.0
        %v622 = vmax.f32 %v588, 0.0
        %v623 = vmax.f32 %v590, 0.0
        %v624 = vmax.f32 %v594, 0.0
        %v625 = vmax.f32 %v596, 0.0
        %v626 = vmax.f32 %v600, 0.0
        %v627 = vmax.f32 %v602, 0.0
        %v628 = vmax.f32 %v606, 0.0
        %v629 = vmax.f32 %v608, 0.0
        %v630 = vmax.f32 %v612, 0.0
        %v631 = vmax.f32 %v614, 0.0
        %v632 = vld [vmem:[%s4] sm:$0xff]
        %v633 = vld [vmem:[%s4 + $0x8] sm:$0xff]
        %v634 = vld [vmem:[%s4 + $0x10] sm:$0xff]
        %v635 = vld [vmem:[%s4 + $0x18] sm:$0xff]
        %v636 = vld [vmem:[%s4 + $0x20] sm:$0xff]
        %v637 = vld [vmem:[%s4 + $0x28] sm:$0xff]
        %v638 = vld [vmem:[%s4 + $0x30] sm:$0xff]
        %v639 = vld [vmem:[%s4 + $0x38] sm:$0xff]
        %v640 = vld [vmem:[%s5] sm:$0xff]
        %v641 = vld [vmem:[%s5 + $0x8] sm:$0xff]
        %v642 = vld [vmem:[%s5 + $0x10] sm:$0xff]
        %v643 = vld [vmem:[%s5 + $0x18] sm:$0xff]
        %v644 = vld [vmem:[%s5 + $0x20] sm:$0xff]
        %v645 = vld [vmem:[%s5 + $0x28] sm:$0xff]
        %v646 = vld [vmem:[%s5 + $0x30] sm:$0xff]
        %v647 = vld [vmem:[%s5 + $0x38] sm:$0xff]
        %649 = vset.pattern.permute.xlu0 0
        %650 = vperm.xlu0 %649, %v640
        %v651 = vpop.permute.xlu0 %650
        %654 = vset.pattern.permute.xlu0 0
        %655 = vperm.xlu0 %654, %v641
        %v656 = vpop.permute.xlu0 %655
        %659 = vset.pattern.permute.xlu0 0
        %660 = vperm.xlu0 %659, %v642
        %v661 = vpop.permute.xlu0 %660
        %664 = vset.pattern.permute.xlu0 0
        %665 = vperm.xlu0 %664, %v643
        %v666 = vpop.permute.xlu0 %665
        %669 = vset.pattern.permute.xlu0 0
        %670 = vperm.xlu0 %669, %v644
        %v671 = vpop.permute.xlu0 %670
        %674 = vset.pattern.permute.xlu0 0
        %675 = vperm.xlu0 %674, %v645
        %v676 = vpop.permute.xlu0 %675
        %679 = vset.pattern.permute.xlu0 0
        %680 = vperm.xlu0 %679, %v646
        %v681 = vpop.permute.xlu0 %680
        %684 = vset.pattern.permute.xlu0 0
        %685 = vperm.xlu0 %684, %v647
        %v686 = vpop.permute.xlu0 %685
        %v689 = vsel %vm478, %v632, 0
        %v692 = vsel %vm478, %v633, 0
        %v695 = vsel %vm478, %v634, 0
        %v698 = vsel %vm478, %v635, 0
        %v701 = vsel %vm478, %v636, 0
        %v704 = vsel %vm478, %v637, 0
        %v707 = vsel %vm478, %v638, 0
        %v710 = vsel %vm478, %v639, 0
        %712 = vmatprep.subr.mxu0 0.0
        %713 = vmatpush1.msra.mxu0 0.0
        %714 = vmatprep.subr.mxu0 0.0
        %715 = vmatpush1.msra.mxu0 0.0
        %716 = vmatprep.subr.mxu0 0.0
        %717 = vmatpush1.msra.mxu0 0.0
        %718 = vmatprep.subr.mxu0 0.0
        %719 = vmatpush1.msra.mxu0 0.0
        %720 = vmatprep.subr.mxu0 0.0
        %721 = vmatpush1.msra.mxu0 0.0
        %722 = vmatprep.subr.mxu0 0.0
        %723 = vmatpush1.msra.mxu0 0.0
        %724 = vmatprep.subr.mxu0 0.0
        %725 = vmatpush1.msra.mxu0 0.0
        %726 = vmatprep.subr.mxu0 0.0
        %727 = vmatpush1.msra.mxu0 0.0
        %728 = vmatprep.subr.mxu0 %v421
        %729 = vmatpush1.msra.mxu0 %v420
        %730 = vmatprep.subr.mxu0 %v419
        %731 = vmatpush1.msra.mxu0 %v418
        %732 = vmatprep.subr.mxu0 %v417
        %733 = vmatpush1.msra.mxu0 %v416
        %734 = vmatprep.subr.mxu0 %v415
        %735 = vmatpush1.msra.mxu0 %v414
        %736 = vmatprep.subr.mxu0 %v413
        %737 = vmatpush1.msra.mxu0 %v412
        %738 = vmatprep.subr.mxu0 %v411
        %739 = vmatpush1.msra.mxu0 %v410
        %740 = vmatprep.subr.mxu0 %v409
        %741 = vmatpush1.msra.mxu0 %v408
        %742 = vmatprep.subr.mxu0 %v407
        %743 = vmatpush1.msra.mxu0 %v406
        %744 = vmatprep.subr.mxu0 0.0
        %745 = vmatpush2.msra.mxu0 0.0
        %746 = vmatprep.subr.mxu0 0.0
        %747 = vmatpush2.msra.mxu0 0.0
        %748 = vmatprep.subr.mxu0 0.0
        %749 = vmatpush2.msra.mxu0 0.0
        %750 = vmatprep.subr.mxu0 0.0
        %751 = vmatpush2.msra.mxu0 0.0
        %752 = vmatprep.subr.mxu0 0.0
        %753 = vmatpush2.msra.mxu0 0.0
        %754 = vmatprep.subr.mxu0 0.0
        %755 = vmatpush2.msra.mxu0 0.0
        %756 = vmatprep.subr.mxu0 0.0
        %757 = vmatpush2.msra.mxu0 0.0
        %758 = vmatprep.subr.mxu0 0.0
        %759 = vmatpush2.msra.mxu0 0.0
        %760 = vmatprep.subr.mxu0 0.0
        %761 = vmatpush2.msra.mxu0 0.0
        %762 = vmatprep.subr.mxu0 0.0
        %763 = vmatpush2.msra.mxu0 0.0
        %764 = vmatprep.subr.mxu0 0.0
        %765 = vmatpush2.msra.mxu0 0.0
        %766 = vmatprep.subr.mxu0 0.0
        %767 = vmatpush2.msra.mxu0 0.0
        %768 = vmatprep.subr.mxu0 0.0
        %769 = vmatpush2.msra.mxu0 0.0
        %770 = vmatprep.subr.mxu0 0.0
        %771 = vmatpush2.msra.mxu0 0.0
        %772 = vmatprep.subr.mxu0 0.0
        %773 = vmatpush2.msra.mxu0 0.0
        %774 = vmatprep.subr.mxu0 0.0
        %775 = vmatpush2.msra.mxu0 0.0
        %776 = vmatprep.mubr.f32.mxu0 0.0
        %777 = vmatmul.mubr.f32.gmra.mxu0 %v689
        %v778 = vpop.f32.mrf.mxu0
        %v779 = vadd.f32 %v651, %v778
        %v780 = vpop.f32.mrf.mxu0
        %v781 = vadd.f32 %v651, %v780
        %782 = vmatprep.mubr.f32.mxu0 0.0
        %783 = vmatmul.mubr.f32.gmra.mxu0 %v692
        %v784 = vpop.f32.mrf.mxu0
        %v785 = vadd.f32 %v656, %v784
        %v786 = vpop.f32.mrf.mxu0
        %v787 = vadd.f32 %v656, %v786
        %788 = vmatprep.mubr.f32.mxu0 0.0
        %789 = vmatmul.mubr.f32.gmra.mxu0 %v695
        %v790 = vpop.f32.mrf.mxu0
        %v791 = vadd.f32 %v661, %v790
        %v792 = vpop.f32.mrf.mxu0
        %v793 = vadd.f32 %v661, %v792
        %794 = vmatprep.mubr.f32.mxu0 0.0
        %795 = vmatmul.mubr.f32.gmra.mxu0 %v698
        %v796 = vpop.f32.mrf.mxu0
        %v797 = vadd.f32 %v666, %v796
        %v798 = vpop.f32.mrf.mxu0
        %v799 = vadd.f32 %v666, %v798
        %800 = vmatprep.mubr.f32.mxu0 0.0
        %801 = vmatmul.mubr.f32.gmra.mxu0 %v701
        %v802 = vpop.f32.mrf.mxu0
        %v803 = vadd.f32 %v671, %v802
        %v804 = vpop.f32.mrf.mxu0
        %v805 = vadd.f32 %v671, %v804
        %806 = vmatprep.mubr.f32.mxu0 0.0
        %807 = vmatmul.mubr.f32.gmra.mxu0 %v704
        %v808 = vpop.f32.mrf.mxu0
        %v809 = vadd.f32 %v676, %v808
        %v810 = vpop.f32.mrf.mxu0
        %v811 = vadd.f32 %v676, %v810
        %812 = vmatprep.mubr.f32.mxu0 0.0
        %813 = vmatmul.mubr.f32.gmra.mxu0 %v707
        %v814 = vpop.f32.mrf.mxu0
        %v815 = vadd.f32 %v681, %v814
        %v816 = vpop.f32.mrf.mxu0
        %v817 = vadd.f32 %v681, %v816
        %818 = vmatprep.mubr.f32.mxu0 0.0
        %819 = vmatmul.mubr.f32.gmra.mxu0 %v710
        %v820 = vpop.f32.mrf.mxu0
        %v821 = vadd.f32 %v686, %v820
        %v822 = vpop.f32.mrf.mxu0
        %v823 = vadd.f32 %v686, %v822
        %824 = vdwg.mxu0
        %v825 = vmax.f32 %v779, 0.0
        %v826 = vmax.f32 %v781, 0.0
        %v827 = vmax.f32 %v785, 0.0
        %v828 = vmax.f32 %v787, 0.0
        %v829 = vmax.f32 %v791, 0.0
        %v830 = vmax.f32 %v793, 0.0
        %v831 = vmax.f32 %v797, 0.0
        %v832 = vmax.f32 %v799, 0.0
        %v833 = vmax.f32 %v803, 0.0
        %v834 = vmax.f32 %v805, 0.0
        %v835 = vmax.f32 %v809, 0.0
        %v836 = vmax.f32 %v811, 0.0
        %v837 = vmax.f32 %v815, 0.0
        %v838 = vmax.f32 %v817, 0.0
        %v839 = vmax.f32 %v821, 0.0
        %v840 = vmax.f32 %v823, 0.0
        %v841 = vadd.f32 %v825, %v616
        %v842 = vadd.f32 %v826, %v617
        %v843 = vadd.f32 %v827, %v618
        %v844 = vadd.f32 %v828, %v619
        %v845 = vadd.f32 %v829, %v620
        %v846 = vadd.f32 %v830, %v621
        %v847 = vadd.f32 %v831, %v622
        %v848 = vadd.f32 %v832, %v623
        %v849 = vadd.f32 %v833, %v624
        %v850 = vadd.f32 %v834, %v625
        %v851 = vadd.f32 %v835, %v626
        %v852 = vadd.f32 %v836, %v627
        %v853 = vadd.f32 %v837, %v628
        %v854 = vadd.f32 %v838, %v629
        %v855 = vadd.f32 %v839, %v630
        %v856 = vadd.f32 %v840, %v631
        %v857 = vld [vmem:[%s6] sm:$0x1]
        %s858 = sld [smem:[#allocation2]]
        %v859 = vstv %s858
        %v861 = vsel %vm478, %v857, 0
        %863 = vmatprep.subr.mxu0 0.0
        %864 = vmatpush1.msra.mxu0 0.0
        %865 = vmatprep.subr.mxu0 0.0
        %866 = vmatpush1.msra.mxu0 0.0
        %867 = vmatprep.subr.mxu0 0.0
        %868 = vmatpush1.msra.mxu0 0.0
        %869 = vmatprep.subr.mxu0 0.0
        %870 = vmatpush1.msra.mxu0 0.0
        %871 = vmatprep.subr.mxu0 0.0
        %872 = vmatpush1.msra.mxu0 0.0
        %873 = vmatprep.subr.mxu0 0.0
        %874 = vmatpush1.msra.mxu0 0.0
        %875 = vmatprep.subr.mxu0 0.0
        %876 = vmatpush1.msra.mxu0 0.0
        %877 = vmatprep.subr.mxu0 0.0
        %878 = vmatpush1.msra.mxu0 0.0
        %879 = vmatprep.subr.mxu0 %v856
        %880 = vmatpush1.msra.mxu0 %v855
        %881 = vmatprep.subr.mxu0 %v854
        %882 = vmatpush1.msra.mxu0 %v853
        %883 = vmatprep.subr.mxu0 %v852
        %884 = vmatpush1.msra.mxu0 %v851
        %885 = vmatprep.subr.mxu0 %v850
        %886 = vmatpush1.msra.mxu0 %v849
        %887 = vmatprep.subr.mxu0 %v848
        %888 = vmatpush1.msra.mxu0 %v847
        %889 = vmatprep.subr.mxu0 %v846
        %890 = vmatpush1.msra.mxu0 %v845
        %891 = vmatprep.subr.mxu0 %v844
        %892 = vmatpush1.msra.mxu0 %v843
        %893 = vmatprep.subr.mxu0 %v842
        %894 = vmatpush1.msra.mxu0 %v841
        %895 = vmatprep.subr.mxu0 0.0
        %896 = vmatpush2.msra.mxu0 0.0
        %897 = vmatprep.subr.mxu0 0.0
        %898 = vmatpush2.msra.mxu0 0.0
        %899 = vmatprep.subr.mxu0 0.0
        %900 = vmatpush2.msra.mxu0 0.0
        %901 = vmatprep.subr.mxu0 0.0
        %902 = vmatpush2.msra.mxu0 0.0
        %903 = vmatprep.subr.mxu0 0.0
        %904 = vmatpush2.msra.mxu0 0.0
        %905 = vmatprep.subr.mxu0 0.0
        %906 = vmatpush2.msra.mxu0 0.0
        %907 = vmatprep.subr.mxu0 0.0
        %908 = vmatpush2.msra.mxu0 0.0
        %909 = vmatprep.subr.mxu0 0.0
        %910 = vmatpush2.msra.mxu0 0.0
        %911 = vmatprep.subr.mxu0 0.0
        %912 = vmatpush2.msra.mxu0 0.0
        %913 = vmatprep.subr.mxu0 0.0
        %914 = vmatpush2.msra.mxu0 0.0
        %915 = vmatprep.subr.mxu0 0.0
        %916 = vmatpush2.msra.mxu0 0.0
        %917 = vmatprep.subr.mxu0 0.0
        %918 = vmatpush2.msra.mxu0 0.0
        %919 = vmatprep.subr.mxu0 0.0
        %920 = vmatpush2.msra.mxu0 0.0
        %921 = vmatprep.subr.mxu0 0.0
        %922 = vmatpush2.msra.mxu0 0.0
        %923 = vmatprep.subr.mxu0 0.0
        %924 = vmatpush2.msra.mxu0 0.0
        %925 = vmatprep.subr.mxu0 0.0
        %926 = vmatpush2.msra.mxu0 0.0
        %927 = vmatprep.mubr.f32.mxu0 0.0
        %928 = vmatmul.mubr.f32.gmra.mxu0 %v861
        %v929 = vpop.f32.mrf.mxu0
        %v930 = vadd.f32 %v859, %v929
        %v931 = vpop.f32.mrf.mxu0
        %v932 = vadd.f32 %v859, %v931
        %933 = vdwg.mxu0
        %v934 = vxor.u32 %v930, 2147483648
        %v935 = vxor.u32 %v932, 2147483648
        %v936 = vmul.f32 %v934, 1.442695
        %v937 = vpow.pop %v936
        %v938 = vmul.f32 %v935, 1.442695
        %v939 = vpow.pop %v938
        %v940 = vadd.f32 %v937, 1.0
        %v941 = vadd.f32 %v939, 1.0
        %v942 = vrcp.pop %v940
        %v943 = vmul.f32 1.0, %v942
        %v944 = vrcp.pop %v941
        %v945 = vmul.f32 1.0, %v944
        %v946 = vadd.f32 %v943, 1.0
        %v947 = vadd.f32 %v945, 1.0
        %v948 = vlaneseq
        %v949 = vshrl.u32 %v948, 7
        %v950 = vsub.s32 0, %v949
        %v951 = vrot.slane %v946, %v950
        %v952 = vlaneseq
        %v953 = vshrl.u32 %v952, 7
        %v954 = vsub.s32 0, %v953
        %v955 = vrot.slane %v947, %v954
        %v956 = vmul.f32 %v406, %v951
        %v957 = vmul.f32 %v407, %v955
        %v958 = vmul.f32 %v408, %v951
        %v959 = vmul.f32 %v409, %v955
        %v960 = vmul.f32 %v410, %v951
        %v961 = vmul.f32 %v411, %v955
        %v962 = vmul.f32 %v412, %v951
        %v963 = vmul.f32 %v413, %v955
        %v964 = vmul.f32 %v414, %v951
        %v965 = vmul.f32 %v415, %v955
        %v966 = vmul.f32 %v416, %v951
        %v967 = vmul.f32 %v417, %v955
        %v968 = vmul.f32 %v418, %v951
        %v969 = vmul.f32 %v419, %v955
        %v970 = vmul.f32 %v420, %v951
        %v971 = vmul.f32 %v421, %v955
        %972 = vst [vmem:[%s386] sm:$0xff] %v956
        %973 = vst [vmem:[%s386 + $0x8] sm:$0xff] %v957
        %974 = vst [vmem:[%s386 + $0x10] sm:$0xff] %v958
        %975 = vst [vmem:[%s386 + $0x18] sm:$0xff] %v959
        %976 = vst [vmem:[%s386 + $0x20] sm:$0xff] %v960
        %977 = vst [vmem:[%s386 + $0x28] sm:$0xff] %v961
        %978 = vst [vmem:[%s386 + $0x30] sm:$0xff] %v962
        %979 = vst [vmem:[%s386 + $0x38] sm:$0xff] %v963
        %980 = vst [vmem:[%s386 + $0x40] sm:$0xff] %v964
        %981 = vst [vmem:[%s386 + $0x48] sm:$0xff] %v965
        %982 = vst [vmem:[%s386 + $0x50] sm:$0xff] %v966
        %983 = vst [vmem:[%s386 + $0x58] sm:$0xff] %v967
        %984 = vst [vmem:[%s386 + $0x60] sm:$0xff] %v968
        %985 = vst [vmem:[%s386 + $0x68] sm:$0xff] %v969
        %986 = vst [vmem:[%s386 + $0x70] sm:$0xff] %v970
        %987 = vst [vmem:[%s386 + $0x78] sm:$0xff] %v971
        %s988 = sand.u32 %s233, 1
        %s989 = scalar_lea.sflag [#allocation5], %s988
        %s990 = sand.u32 %s233, 1
        %s991 = smul.addr %s990, 128
        %s992 = scalar_lea.vmem [#allocation8], %s991
        // Predicated region
        $region61: #{tpu_custom_call.1} parent=51 // pred_check
          %p993 = pneg %p243
        $region62: #{tpu_custom_call.1} parent=51 // pred_check_branch
          %995 = sbr.rel (%p993) target = $region64
        $region63: #{tpu_custom_call.1} parent=51 // pred_region
          %s996 = smul.u32 2, %s34
          %s998 = ssub.s32 2048, 2048
          %999 = vsyncadd %s989, %s998
          %s1000 = smul.addr %s33, 16
          %s1001 = sadd.s32 %s996, %s1000
          %s1002 = smul.addr %s1001, 128
          %s1003 = scalar_lea.hbm %s8, %s1002
          %s1004 = sshll.u32 %s992, 4
          %s1005 = int_to_ptr.vmem [resolvable:$true] %s1004
          %1010 = dma.vmem_to_hbm [thread:$0]  %s1005, 2048, %s1003, %s989, 256, 256, 16
        $region64: #{tpu_custom_call.1} parent=51 // pred_fallthru
          _
      $region52: #{tpu_custom_call.1} parent=5 // pred_fallthru
        _
      %p1011 = scmp.le.s32.totalorder 2, %s24
      // Predicated region
      $region65: #{tpu_custom_call.1} parent=5 // pred_check
        %p1012 = pneg %p1011
      $region66: #{tpu_custom_call.1} parent=5 // pred_check_branch
        %1014 = sbr.rel (%p1012) target = $region68
      $region67: #{tpu_custom_call.1} parent=5 // pred_region
        %s1015 = ssub.s32 %s24, 2
        // Predicated region
        $region69: #{tpu_custom_call.1} parent=67 // pred_check
          %p1016 = pneg %p249
        $region70: #{tpu_custom_call.1} parent=67 // pred_check_branch
          %1018 = sbr.rel (%p1016) target = $region72
        $region71: #{tpu_custom_call.1} parent=67 // pred_region
          %s1019 = sand.u32 %s234, 1
          %s1020 = scalar_lea.sflag [#allocation5], %s1019
          %s1021 = sand.u32 %s234, 1
          %s1022 = smul.addr %s1021, 128
          %s1023 = scalar_lea.vmem [#allocation8], %s1022
          %1024 = dma.done %s1020, 2048
        $region72: #{tpu_custom_call.1} parent=67 // pred_fallthru
          _
      $region68: #{tpu_custom_call.1} parent=5 // pred_fallthru
        _
    $region6: #{tpu_custom_call.1} parent=1 // loop_footer
      %s28 = sadd.s32 1, %s24
    $region7: #{tpu_custom_call.1} parent=1 // loop_footer_branch
      %23 = sbr.rel target = $region3
    $region8: #{tpu_custom_call.1} parent=1 // loop_exit
      _
    %1025 = vsyncpa [#allocation4], 1
    %s1026 = scalar_lea.sflag [#allocation4], 1
    %1027 = vsyncpa %s1026, 1
    %1028 = vsyncpa [#allocation7], 1
    %s1029 = scalar_lea.sflag [#allocation7], 1
    %1030 = vsyncpa %s1029, 1
    %1031 = vsyncpa [#allocation5], 1
    %s1032 = scalar_lea.sflag [#allocation5], 1
    %1033 = vsyncpa %s1032, 1

</llo_original>
